<compile_context>
chip_gen: v7x
topology: tpu7x:2x2x1
jax: 0.10.0
libtpu: 0.0.40
codegen_flags: <defaults>
</compile_context>

<pallas_src>
import functools

import jax
import jax.numpy as jnp
from jax import lax
from jax.experimental import pallas as pl
from jax.experimental.pallas import tpu as pltpu


_LANE = 128
# Budget for the double-buffered input blocks (2 inputs x 2 pipeline buffers).
_INPUT_VMEM_BUDGET = 12 * 1024 * 1024


def _sublane(itemsize):
    """Minimum sublane multiple for the dtype: 8 (f32), 16 (bf16), 32 (8-bit)."""
    return max(8, 32 // int(itemsize))


def _corr_kernel_single(out_ref, tgt_ref, corr_ref, *, eps, n_total):
    """Whole batch in one block: exact centered statistics, no scratch."""
    o = out_ref[...].astype(jnp.float32)
    t = tgt_ref[...].astype(jnp.float32)
    inv_n = jnp.float32(1.0 / n_total)

    m_o = jnp.sum(o, axis=0, keepdims=True) * inv_n
    m_t = jnp.sum(t, axis=0, keepdims=True) * inv_n
    do = o - m_o
    dt = t - m_t
    var_o = jnp.sum(do * do, axis=0, keepdims=True) * inv_n
    var_t = jnp.sum(dt * dt, axis=0, keepdims=True) * inv_n
    cov = jnp.sum(do * dt, axis=0, keepdims=True) * inv_n
    # rsqrt routes to the EUP instead of a VPU divide + sqrt.
    corr = cov * lax.rsqrt((var_o + eps) * (var_t + eps))
    corr_ref[...] = corr.astype(corr_ref.dtype)


def _corr_kernel_tiled(out_ref, tgt_ref, corr_ref, shift_ref, sums_ref, *,
                       eps, n_total, batch_tile, ragged):
    """Grid = (feature tiles [parallel], batch tiles [arbitrary / reduction])."""
    k = pl.program_id(1)

    o = out_ref[...].astype(jnp.float32)
    t = tgt_ref[...].astype(jnp.float32)

    @pl.when(k == 0)
    def _init():
        # The first batch tile is always full (batch_tile < n here), so its
        # per-feature means are a valid shift: correlation is shift-invariant,
        # and this keeps the raw-moment accumulation well conditioned in f32.
        shift_ref[0:1, :] = jnp.mean(o, axis=0, keepdims=True)
        shift_ref[1:2, :] = jnp.mean(t, axis=0, keepdims=True)
        sums_ref[...] = jnp.zeros(sums_ref.shape, sums_ref.dtype)

    do = o - shift_ref[0:1, :]
    dt = t - shift_ref[1:2, :]

    if ragged:
        # Mask rows past the true batch size (only the last tile is partial).
        # Masking AFTER the shift subtraction (with a select, so garbage/NaN
        # padding cannot leak through) makes padded rows contribute 0 to all
        # five sums while n_total stays the real batch size.
        rows = lax.broadcasted_iota(jnp.int32, do.shape, 0)
        valid = rows < (n_total - k * batch_tile)
        do = jnp.where(valid, do, 0.0)
        dt = jnp.where(valid, dt, 0.0)

    sums_ref[0:1, :] += jnp.sum(do, axis=0, keepdims=True)
    sums_ref[1:2, :] += jnp.sum(dt, axis=0, keepdims=True)
    sums_ref[2:3, :] += jnp.sum(do * do, axis=0, keepdims=True)
    sums_ref[3:4, :] += jnp.sum(dt * dt, axis=0, keepdims=True)
    sums_ref[4:5, :] += jnp.sum(do * dt, axis=0, keepdims=True)

    @pl.when(k == pl.num_programs(1) - 1)
    def _finalize():
        inv_n = jnp.float32(1.0 / n_total)
        m_o = sums_ref[0:1, :] * inv_n
        m_t = sums_ref[1:2, :] * inv_n
        var_o = jnp.maximum(sums_ref[2:3, :] * inv_n - m_o * m_o, 0.0)
        var_t = jnp.maximum(sums_ref[3:4, :] * inv_n - m_t * m_t, 0.0)
        cov = sums_ref[4:5, :] * inv_n - m_o * m_t
        corr = cov * lax.rsqrt((var_o + eps) * (var_t + eps))
        corr_ref[...] = corr.astype(corr_ref.dtype)


def _select_tiles(n, d_pad, itemsize):
    """Pick (batch_tile, lane_tile); batch_tile == n selects the single-pass kernel."""

    def fits(bt, td):
        # 2 inputs x 2 pipeline buffers per block.
        return 2 * 2 * bt * td * itemsize <= _INPUT_VMEM_BUDGET

    lane_cands = [t for t in (2048, 1024, 512, 256, 128) if d_pad % t == 0]
    # Prefer an even number (>= 2) of feature tiles so v7x's two TensorCores get
    # equal halves of the "parallel" feature axis; then >= 2 tiles; then any.
    even = [t for t in lane_cands if (d_pad // t) >= 2 and (d_pad // t) % 2 == 0]
    multi = [t for t in lane_cands if (d_pad // t) >= 2]
    pref = even or multi or lane_cands

    # Path 1: whole batch in one block -> exact single-pass centered statistics
    # (least VALU work).  Pick the widest lane tile that fits the budget.
    for td in pref:
        if fits(n, td):
            return n, td

    # Path 2: batch-tiled accumulation.  Widest lane tile (longer contiguous DMA
    # row segments, the dominant cost of this mem-bound kernel) with the largest
    # sublane-aligned batch tile inside the budget.  bt need not divide n: the
    # last, partial tile is masked in-kernel.
    sub = _sublane(itemsize)
    td = pref[0]
    bt = (_INPUT_VMEM_BUDGET // (2 * 2 * td * itemsize)) // sub * sub
    bt = max(bt, sub)
    return bt, td


def corr(output, target, *, eps=1e-12, batch_tile=None, lane_tile=None):
    """Pallas equivalent of Corr.forward(output, target) for 2-D (N, D) inputs."""
    assert output.shape == target.shape, "output/target shape mismatch"
    assert output.ndim == 2, "kernel expects (batch, features) inputs"
    n, d = output.shape
    assert n >= 1 and d >= 1

    # Pad the feature axis to a lane multiple; padded (all-zero) columns give
    # corr == 0 and are sliced off below.
    d_pad = ((d + _LANE - 1) // _LANE) * _LANE
    if d_pad != d:
        padding = ((0, 0), (0, d_pad - d))
        output = jnp.pad(output, padding)
        target = jnp.pad(target, padding)

    itemsize = jnp.dtype(output.dtype).itemsize
    bt_auto, td_auto = _select_tiles(n, d_pad, itemsize)
    td = int(lane_tile) if lane_tile is not None else td_auto
    bt = int(batch_tile) if batch_tile is not None else bt_auto
    assert d_pad % td == 0, "lane_tile must divide the padded feature dim"
    bt = min(bt, n)
    single = bt == n
    if not single:
        sub = _sublane(itemsize)
        assert bt % sub == 0, (
            f"batch_tile must be a multiple of the dtype's sublane tile ({sub}) "
            "when it does not cover the whole batch")
    ragged = (not single) and (n % bt != 0)
    num_k = 1 if single else pl.cdiv(n, bt)

    cost = pl.CostEstimate(
        flops=10 * n * d_pad,
        transcendentals=d_pad,
        bytes_accessed=2 * n * d_pad * itemsize + 4 * d_pad,
    )
    out_shape = jax.ShapeDtypeStruct((1, d_pad), jnp.float32)

    def make_call(extra_buffering):
        if single:
            kernel = functools.partial(_corr_kernel_single,
                                       eps=float(eps), n_total=n)
            grid = (d_pad // td,)
            in_specs = [pl.BlockSpec((n, td), lambda j: (0, j)),
                        pl.BlockSpec((n, td), lambda j: (0, j))]
            out_specs = pl.BlockSpec((1, td), lambda j: (0, j))
            scratch_shapes = ()
            dim_sem = ("parallel",)
            nbuf = 2
        else:
            kernel = functools.partial(_corr_kernel_tiled, eps=float(eps),
                                       n_total=n, batch_tile=bt, ragged=ragged)
            grid = (d_pad // td, num_k)
            if extra_buffering:
                # 3-deep input buffering: hides DMA-issue jitter on v7x where
                # per-tile compute approaches DMA time; negligible VMEM cost.
                in_specs = [
                    pl.BlockSpec((bt, td), lambda j, k: (k, j),
                                 pipeline_mode=pl.Buffered(3)),
                    pl.BlockSpec((bt, td), lambda j, k: (k, j),
                                 pipeline_mode=pl.Buffered(3)),
                ]
                nbuf = 3
            else:
                in_specs = [pl.BlockSpec((bt, td), lambda j, k: (k, j)),
                            pl.BlockSpec((bt, td), lambda j, k: (k, j))]
                nbuf = 2
            out_specs = pl.BlockSpec((1, td), lambda j, k: (0, j))
            scratch_shapes = (
                pltpu.VMEM((2, td), jnp.float32),  # shift: first tile's means
                pltpu.VMEM((5, td), jnp.float32),  # dx, dy, dx2, dy2, dxy sums
            )
            dim_sem = ("parallel", "arbitrary")

        # vmem_limit: actual pipelined input blocks + 4 MiB slack, floored at
        # 16 MiB (v5e default scoped limit) and capped at 32 MiB so v7x's
        # 64 MiB VMEM keeps headroom; grown only if the caller forces tiles
        # larger than the auto budget.
        in_block_bytes = 2 * nbuf * bt * td * itemsize
        vmem_limit = int(min(max(in_block_bytes + (4 << 20), 16 << 20), 32 << 20))
        vmem_limit = max(vmem_limit, in_block_bytes + (4 << 20))

        return pl.pallas_call(
            kernel,
            out_shape=out_shape,
            grid_spec=pltpu.PrefetchScalarGridSpec(
                num_scalar_prefetch=0,
                grid=grid,
                in_specs=in_specs,
                out_specs=out_specs,
                scratch_shapes=scratch_shapes,
            ),
            compiler_params=pltpu.CompilerParams(
                dimension_semantics=dim_sem,
                vmem_limit_bytes=vmem_limit,
            ),
            cost_estimate=cost,
        )

    if single:
        result = make_call(False)(output, target)
    else:
        try:
            result = make_call(True)(output, target)
        except Exception:
            # pipeline_mode / pl.Buffered not supported by this JAX build:
            # fall back to the default double-buffered pipeline.
            result = make_call(False)(output, target)

    if d_pad != d:
        result = result[:, :d]
    return result


def _corr_ref(output, target, eps=1e-12):
    """Pure-JAX reference mirroring the PyTorch forward exactly."""
    delta_out = output - jnp.mean(output, axis=0, keepdims=True)
    delta_target = target - jnp.mean(target, axis=0, keepdims=True)
    var_out = jnp.mean(delta_out ** 2, axis=0, keepdims=True)
    var_target = jnp.mean(delta_target ** 2, axis=0, keepdims=True)
    return jnp.mean(delta_out * delta_target, axis=0, keepdims=True) / jnp.sqrt(
        (var_out + eps) * (var_target + eps)
    )


if __name__ == "__main__":
    key = jax.random.PRNGKey(0)
    k_out, k_tgt = jax.random.split(key)

    # Case 1: small (batch, features) -> single-pass whole-batch kernel.
    batch, features = 8, 256
    output = jax.random.normal(k_out, (batch, features), dtype=jnp.float32)
    target = (jax.random.normal(k_tgt, (batch, features), dtype=jnp.float32)
              + 0.3 * output)
    result = jax.block_until_ready(corr(output, target))
    expected = _corr_ref(output, target)
    assert result.shape == (1, features)
    assert jnp.allclose(result, expected, atol=1e-5, rtol=1e-5)

    # Case 2: batch-tiled accumulator path + feature padding (D not a multiple
    # of 128), with nonzero means to exercise the shift-by-first-tile trick.
    batch2, features2 = 32, 200
    out2 = jax.random.normal(jax.random.PRNGKey(1), (batch2, features2),
                             dtype=jnp.float32) + 2.0
    tgt2 = jax.random.normal(jax.random.PRNGKey(2), (batch2, features2),
                             dtype=jnp.float32) - 1.0
    res2 = jax.block_until_ready(corr(out2, tgt2, batch_tile=8, lane_tile=128))
    exp2 = _corr_ref(out2, tgt2)
    assert res2.shape == (1, features2)
    assert jnp.allclose(res2, exp2, atol=1e-5, rtol=1e-5)

    # Case 3: ragged batch (N not a multiple of the batch tile) -> masked
    # partial last batch tile in the tiled kernel.
    batch3, features3 = 30, 256
    out3 = jax.random.normal(jax.random.PRNGKey(3), (batch3, features3),
                             dtype=jnp.float32) * 1.5 + 4.0
    tgt3 = (jax.random.normal(jax.random.PRNGKey(4), (batch3, features3),
                              dtype=jnp.float32) - 0.7 * out3)
    res3 = jax.block_until_ready(corr(out3, tgt3, batch_tile=8, lane_tile=128))
    exp3 = _corr_ref(out3, tgt3)
    assert res3.shape == (1, features3)
    assert jnp.allclose(res3, exp3, atol=1e-5, rtol=1e-5)

    print("KERNEL_OK")
</pallas_src>

<mosaic_0001>
module attributes {stable_mosaic.version = 11 : i64} {
  func.func @_corr_kernel_single(%arg0: i32, %arg1: memref<8x128xf32, #tpu.memory_space<vmem>>, %arg2: memref<8x128xf32, #tpu.memory_space<vmem>>, %arg3: memref<1x128xf32, #tpu.memory_space<vmem>>) attributes {dimension_semantics = [#tpu.dimension_semantics<parallel>], iteration_bounds = array<i64: 2>, scalar_prefetch = 0 : i64, scratch_operands = 0 : i64, tpu.core_type = #tpu.core_type<tc>, window_params = [{transform_indices = @transform_0, window_bounds = array<i64: 8, 128>}, {transform_indices = @transform_1, window_bounds = array<i64: 8, 128>}, {transform_indices = @transform_2, window_bounds = array<i64: 1, 128>}]} {
    %c0 = arith.constant 0 : index
    %c0_0 = arith.constant 0 : index
    %0 = vector.load %arg1[%c0, %c0_0] : memref<8x128xf32, #tpu.memory_space<vmem>>, vector<8x128xf32>
    %c0_1 = arith.constant 0 : index
    %c0_2 = arith.constant 0 : index
    %1 = vector.load %arg2[%c0_1, %c0_2] : memref<8x128xf32, #tpu.memory_space<vmem>>, vector<8x128xf32>
    %cst = arith.constant dense<0.000000e+00> : vector<128xf32>
    %2 = vector.multi_reduction <add>, %0, %cst [0] : vector<8x128xf32> to vector<128xf32>
    %3 = vector.shape_cast %2 : vector<128xf32> to vector<1x128xf32>
    %cst_3 = arith.constant 1.250000e-01 : f32
    %4 = vector.broadcast %cst_3 : f32 to vector<1x128xf32>
    %5 = arith.mulf %3, %4 : vector<1x128xf32>
    %cst_4 = arith.constant dense<0.000000e+00> : vector<128xf32>
    %6 = vector.multi_reduction <add>, %1, %cst_4 [0] : vector<8x128xf32> to vector<128xf32>
    %7 = vector.shape_cast %6 : vector<128xf32> to vector<1x128xf32>
    %cst_5 = arith.constant 1.250000e-01 : f32
    %8 = vector.broadcast %cst_5 : f32 to vector<1x128xf32>
    %9 = arith.mulf %7, %8 : vector<1x128xf32>
    %10 = vector.broadcast %5 : vector<1x128xf32> to vector<8x128xf32>
    %11 = arith.subf %0, %10 : vector<8x128xf32>
    %12 = vector.broadcast %9 : vector<1x128xf32> to vector<8x128xf32>
    %13 = arith.subf %1, %12 : vector<8x128xf32>
    %14 = arith.mulf %11, %11 : vector<8x128xf32>
    %cst_6 = arith.constant dense<0.000000e+00> : vector<128xf32>
    %15 = vector.multi_reduction <add>, %14, %cst_6 [0] : vector<8x128xf32> to vector<128xf32>
    %16 = vector.shape_cast %15 : vector<128xf32> to vector<1x128xf32>
    %cst_7 = arith.constant 1.250000e-01 : f32
    %17 = vector.broadcast %cst_7 : f32 to vector<1x128xf32>
    %18 = arith.mulf %16, %17 : vector<1x128xf32>
    %19 = arith.mulf %13, %13 : vector<8x128xf32>
    %cst_8 = arith.constant dense<0.000000e+00> : vector<128xf32>
    %20 = vector.multi_reduction <add>, %19, %cst_8 [0] : vector<8x128xf32> to vector<128xf32>
    %21 = vector.shape_cast %20 : vector<128xf32> to vector<1x128xf32>
    %cst_9 = arith.constant 1.250000e-01 : f32
    %22 = vector.broadcast %cst_9 : f32 to vector<1x128xf32>
    %23 = arith.mulf %21, %22 : vector<1x128xf32>
    %24 = arith.mulf %11, %13 : vector<8x128xf32>
    %cst_10 = arith.constant dense<0.000000e+00> : vector<128xf32>
    %25 = vector.multi_reduction <add>, %24, %cst_10 [0] : vector<8x128xf32> to vector<128xf32>
    %26 = vector.shape_cast %25 : vector<128xf32> to vector<1x128xf32>
    %cst_11 = arith.constant 1.250000e-01 : f32
    %27 = vector.broadcast %cst_11 : f32 to vector<1x128xf32>
    %28 = arith.mulf %26, %27 : vector<1x128xf32>
    %cst_12 = arith.constant 9.99999996E-13 : f32
    %29 = vector.broadcast %cst_12 : f32 to vector<1x128xf32>
    %30 = arith.addf %18, %29 : vector<1x128xf32>
    %cst_13 = arith.constant 9.99999996E-13 : f32
    %31 = vector.broadcast %cst_13 : f32 to vector<1x128xf32>
    %32 = arith.addf %23, %31 : vector<1x128xf32>
    %33 = arith.mulf %30, %32 : vector<1x128xf32>
    %34 = math.rsqrt %33 : vector<1x128xf32>
    %35 = arith.mulf %28, %34 : vector<1x128xf32>
    %c0_14 = arith.constant 0 : index
    %c0_15 = arith.constant 0 : index
    %36 = vector.load %arg3[%c0_14, %c0_15] : memref<1x128xf32, #tpu.memory_space<vmem>>, vector<1x128xf32>
    tpu.vector_store %arg3[%c0_14, %c0_15], %35 {strides = array<i32>} : memref<1x128xf32, #tpu.memory_space<vmem>>, vector<1x128xf32>,
    return
  }
  func.func @transform_0(%arg0: i32) -> (i32, i32) {
    %c0_i32 = arith.constant 0 : i32
    %c0_i32_0 = arith.constant 0 : i32
    return %c0_i32, %arg0 : i32, i32
  }
  func.func @transform_1(%arg0: i32) -> (i32, i32) {
    %c0_i32 = arith.constant 0 : i32
    %c0_i32_0 = arith.constant 0 : i32
    return %c0_i32, %arg0 : i32, i32
  }
  func.func @transform_2(%arg0: i32) -> (i32, i32) {
    %c0_i32 = arith.constant 0 : i32
    %c0_i32_0 = arith.constant 0 : i32
    return %c0_i32, %arg0 : i32, i32
  }
}

</mosaic_0001>

<llo_original>
// kernel: tpu_custom_call.1
$region0: #{tpu_custom_call.1}
  #allocation0 [shape = 'u32[]', space=smem, size = 0x4, offset = 0x4, fixed_abs, tag = 'smem constant byte address 0x4 - core index']
  #allocation1 [shape = 'u32[144,128]{1,0:T(1,128)}', space=vmem, size = 0x12000, scoped, tag = 'internal scratch']
  %s0 = inlined_call_operand.hbm [shape: f32[8,256], index: 0, kind: input, shape index: {}]
  %s1 = inlined_call_operand.hbm [shape: f32[8,256], index: 1, kind: input, shape index: {}]
  %s2 = inlined_call_operand.hbm [shape: f32[1,256], index: 2, kind: output, shape index: {}]
  %s3 = sld [smem:[#allocation0]]
  $region49: #{tpu_custom_call.1} parent=0
    _
  %s5 = ssub.s32 1, %s3
  %s6 = scalar_select 0, %s5, %s3
  $region1: #{tpu_custom_call.1} parent=0
    #allocation2 [shape = 'u8[8192]{0}', space=vmem, size = 0x2000, scoped, tag = 'input window, operand 0']
    #allocation3 [shape = 's32[2]{0}', space=sflag, size = 0x8, scoped, tag = 'scoped memory for tpu_custom_call.1']
    #allocation4 [shape = 's32[2]{0}', space=sflag, size = 0x8, scoped, tag = 'scoped memory for tpu_custom_call.1']
    #allocation5 [shape = 'u8[8192]{0}', space=vmem, size = 0x2000, scoped, tag = 'input window, operand 1']
    #allocation6 [shape = 's32[2]{0}', space=sflag, size = 0x8, scoped, tag = 'scoped memory for tpu_custom_call.1']
    #allocation7 [shape = 'u8[1024]{0}', space=vmem, size = 0x400, scoped, tag = 'output window, operand 0']
    %7 = vsyncpa [#allocation3], 0
    %s8 = scalar_lea.sflag [#allocation3], 1
    %9 = vsyncpa %s8, 0
    %10 = vsyncpa [#allocation6], 0
    %s11 = scalar_lea.sflag [#allocation6], 1
    %12 = vsyncpa %s11, 0
    %13 = vsyncpa [#allocation4], 0
    %s14 = scalar_lea.sflag [#allocation4], 1
    %15 = vsyncpa %s14, 0
    loop: start=0, step=1, limit=4
    $region2: #{tpu_custom_call.1} parent=1 // loop_pre_header
      _
    $region3: #{tpu_custom_call.1} parent=1 // loop_header
      %s17 = sphi 0, %s21
      %p18 = scmp.ge.s32.totalorder %s17, 4
      %s27 = sphi 0, %s29
      %s30 = sphi 0, %s27
      %s31 = sphi 0, %s30
      %s47 = sphi 0, %s31
      %s53 = sphi 0, %s55
      %s56 = sphi 0, %s53
      %s57 = sphi 0, %s56
      %s73 = sphi 0, %s57
      %s79 = sphi 0, %s81
      %s82 = sphi 0, %s79
      %s83 = sphi 0, %s82
      %s99 = sphi 0, %s83
    $region4: #{tpu_custom_call.1} parent=1 // loop_header_branch
      %20 = sbr.rel (%p18) target = $region8
    $region5: #{tpu_custom_call.1} parent=1 // loop_body
      %s22 = ssub.s32 %s17, 1
      %s23 = ssub.s32 %s17, 2
      %s24 = sadd.s32 %s17, 1
      %s25 = ssub.s32 %s17, %s24
      %p26 = scmp.eq.s32.totalorder %s25, 0
      %s28 = sadd.s32 %s27, 1
      %s29 = scalar_select %p26, %s27, %s28
      %p32 = pneg %p26
      %p33 = scmp.eq.s32.totalorder %s17, 1
      %p34 = por %p32, %p33
      %p35 = scmp.ne.s32.totalorder %s27, %s30
      %p36 = scmp.eq.s32.totalorder %s17, 0
      %p37 = por %p35, %p36
      %p38 = scmp.ne.s32.totalorder %s27, %s30
      %p39 = scmp.eq.s32.totalorder %s22, 1
      %p40 = por %p38, %p39
      %p41 = scmp.ne.s32.totalorder %s30, %s31
      %p42 = scmp.eq.s32.totalorder %s22, 0
      %p43 = por %p41, %p42
      %p44 = scmp.ne.s32.totalorder %s30, %s31
      %p45 = scmp.eq.s32.totalorder %s23, 1
      %p46 = por %p44, %p45
      %p48 = scmp.ne.s32.totalorder %s31, %s47
      %p49 = scmp.eq.s32.totalorder %s23, 0
      %p50 = por %p48, %p49
      %s51 = ssub.s32 %s17, %s24
      %p52 = scmp.eq.s32.totalorder %s51, 0
      %s54 = sadd.s32 %s53, 1
      %s55 = scalar_select %p52, %s53, %s54
      %p58 = pneg %p52
      %p59 = scmp.eq.s32.totalorder %s17, 1
      %p60 = por %p58, %p59
      %p61 = scmp.ne.s32.totalorder %s53, %s56
      %p62 = scmp.eq.s32.totalorder %s17, 0
      %p63 = por %p61, %p62
      %p64 = scmp.ne.s32.totalorder %s53, %s56
      %p65 = scmp.eq.s32.totalorder %s22, 1
      %p66 = por %p64, %p65
      %p67 = scmp.ne.s32.totalorder %s56, %s57
      %p68 = scmp.eq.s32.totalorder %s22, 0
      %p69 = por %p67, %p68
      %p70 = scmp.ne.s32.totalorder %s56, %s57
      %p71 = scmp.eq.s32.totalorder %s23, 1
      %p72 = por %p70, %p71
      %p74 = scmp.ne.s32.totalorder %s57, %s73
      %p75 = scmp.eq.s32.totalorder %s23, 0
      %p76 = por %p74, %p75
      %s77 = ssub.s32 %s17, %s24
      %p78 = scmp.eq.s32.totalorder %s77, 0
      %s80 = sadd.s32 %s79, 1
      %s81 = scalar_select %p78, %s79, %s80
      %p84 = pneg %p78
      %p85 = scmp.eq.s32.totalorder %s17, 1
      %p86 = por %p84, %p85
      %p87 = scmp.ne.s32.totalorder %s79, %s82
      %p88 = scmp.eq.s32.totalorder %s17, 0
      %p89 = por %p87, %p88
      %p90 = scmp.ne.s32.totalorder %s79, %s82
      %p91 = scmp.eq.s32.totalorder %s22, 1
      %p92 = por %p90, %p91
      %p93 = scmp.ne.s32.totalorder %s82, %s83
      %p94 = scmp.eq.s32.totalorder %s22, 0
      %p95 = por %p93, %p94
      %p96 = scmp.ne.s32.totalorder %s82, %s83
      %p97 = scmp.eq.s32.totalorder %s23, 1
      %p98 = por %p96, %p97
      %p100 = scmp.ne.s32.totalorder %s83, %s99
      %p101 = scmp.eq.s32.totalorder %s23, 0
      %p102 = por %p100, %p101
      %p103 = scmp.le.s32.totalorder 1, %s17
      %p104 = scmp.lt.s32.totalorder %s17, 3
      %p105 = pnand %p103, %p104
      %p106 = pneg %p105
      // Predicated region
      $region9: #{tpu_custom_call.1} parent=5 // pred_check
        _
      $region10: #{tpu_custom_call.1} parent=5 // pred_check_branch
        %108 = sbr.rel (%p105) target = $region12
      $region11: #{tpu_custom_call.1} parent=5 // pred_region
        %s109 = ssub.s32 %s17, 1
      $region12: #{tpu_custom_call.1} parent=5 // pred_fallthru
        _
      %p110 = scmp.lt.s32.totalorder %s17, 2
      // Predicated region
      $region13: #{tpu_custom_call.1} parent=5 // pred_check
        %p111 = pneg %p110
      $region14: #{tpu_custom_call.1} parent=5 // pred_check_branch
        %113 = sbr.rel (%p111) target = $region16
      $region15: #{tpu_custom_call.1} parent=5 // pred_region
        // Predicated region
        $region17: #{tpu_custom_call.1} parent=15 // pred_check
          %p114 = pneg %p37
        $region18: #{tpu_custom_call.1} parent=15 // pred_check_branch
          %116 = sbr.rel (%p114) target = $region20
        $region19: #{tpu_custom_call.1} parent=15 // pred_region
          %s117 = sand.u32 %s27, 1
          %s118 = scalar_lea.sflag [#allocation3], %s117
          %s119 = sand.u32 %s27, 1
          %s120 = smul.addr %s119, 8
          %s121 = scalar_lea.vmem [#allocation2], %s120
          %s123 = ssub.s32 128, 128
          %124 = vsyncadd %s118, %s123
          %s125 = smul.addr %s17, 128
          %s126 = scalar_lea.hbm %s0, %s125
          %s128 = sshll.u32 %s121, 4
          %s129 = int_to_ptr.vmem [resolvable:$true] %s128
          %131 = dma.hbm_to_vmem [thread:$0]  %s126, 128, %s129, %s118
        $region20: #{tpu_custom_call.1} parent=15 // pred_fallthru
          _
        // Predicated region
        $region21: #{tpu_custom_call.1} parent=15 // pred_check
          %p132 = pneg %p63
        $region22: #{tpu_custom_call.1} parent=15 // pred_check_branch
          %134 = sbr.rel (%p132) target = $region24
        $region23: #{tpu_custom_call.1} parent=15 // pred_region
          %s135 = sand.u32 %s53, 1
          %s136 = scalar_lea.sflag [#allocation6], %s135
          %s137 = sand.u32 %s53, 1
          %s138 = smul.addr %s137, 8
          %s139 = scalar_lea.vmem [#allocation5], %s138
          %s141 = ssub.s32 128, 128
          %142 = vsyncadd %s136, %s141
          %s143 = smul.addr %s17, 128
          %s144 = scalar_lea.hbm %s1, %s143
          %s146 = sshll.u32 %s139, 4
          %s147 = int_to_ptr.vmem [resolvable:$true] %s146
          %149 = dma.hbm_to_vmem [thread:$0]  %s144, 128, %s147, %s136
        $region24: #{tpu_custom_call.1} parent=15 // pred_fallthru
          _
      $region16: #{tpu_custom_call.1} parent=5 // pred_fallthru
        _
      %p150 = scmp.le.s32.totalorder 1, %s17
      %p151 = scmp.lt.s32.totalorder %s17, 3
      %p152 = pnand %p150, %p151
      %p153 = pneg %p152
      // Predicated region
      $region25: #{tpu_custom_call.1} parent=5 // pred_check
        _
      $region26: #{tpu_custom_call.1} parent=5 // pred_check_branch
        %155 = sbr.rel (%p152) target = $region28
      $region27: #{tpu_custom_call.1} parent=5 // pred_region
        %s156 = ssub.s32 %s17, 1
        %s157 = sand.u32 %s30, 1
        %s158 = scalar_lea.sflag [#allocation3], %s157
        %s159 = sand.u32 %s30, 1
        %s160 = smul.addr %s159, 8
        %s161 = scalar_lea.vmem [#allocation2], %s160
        // Predicated region
        $region29: #{tpu_custom_call.1} parent=27 // pred_check
          %p162 = pneg %p43
        $region30: #{tpu_custom_call.1} parent=27 // pred_check_branch
          %164 = sbr.rel (%p162) target = $region32
        $region31: #{tpu_custom_call.1} parent=27 // pred_region
          %165 = dma.done %s158, 128
        $region32: #{tpu_custom_call.1} parent=27 // pred_fallthru
          _
        %s166 = sand.u32 %s56, 1
        %s167 = scalar_lea.sflag [#allocation6], %s166
        %s168 = sand.u32 %s56, 1
        %s169 = smul.addr %s168, 8
        %s170 = scalar_lea.vmem [#allocation5], %s169
        // Predicated region
        $region33: #{tpu_custom_call.1} parent=27 // pred_check
          %p171 = pneg %p69
        $region34: #{tpu_custom_call.1} parent=27 // pred_check_branch
          %173 = sbr.rel (%p171) target = $region36
        $region35: #{tpu_custom_call.1} parent=27 // pred_region
          %174 = dma.done %s167, 128
        $region36: #{tpu_custom_call.1} parent=27 // pred_fallthru
          _
        %s175 = sand.u32 %s30, 1
        %s176 = scalar_lea.sflag [#allocation3], %s175
        %s177 = sand.u32 %s30, 1
        %s178 = smul.addr %s177, 8
        %s179 = scalar_lea.vmem [#allocation2], %s178
        %p180 = pneg %p43
        %p181 = pneg %p40
        %s182 = sand.u32 %s56, 1
        %s183 = scalar_lea.sflag [#allocation6], %s182
        %s184 = sand.u32 %s56, 1
        %s185 = smul.addr %s184, 8
        %s186 = scalar_lea.vmem [#allocation5], %s185
        %p187 = pneg %p69
        %p188 = pneg %p66
        %p189 = pneg %p95
        %p190 = pneg %p92
        %s191 = sand.u32 %s82, 1
        %s192 = scalar_lea.sflag [#allocation4], %s191
        %s193 = sand.u32 %s82, 1
        %s194 = scalar_lea.vmem [#allocation7], %s193
        %v195 = vld [vmem:[%s161] sm:$0xff]
        %v196 = vld [vmem:[%s170] sm:$0xff]
        %v197 = vrot.slane %v195, 4
        %v198 = vadd.f32 %v195, %v197
        %v199 = vrot.slane %v198, 2
        %v200 = vadd.f32 %v198, %v199
        %v201 = vrot.slane %v200, 1
        %v202 = vadd.f32 %v200, %v201
        %v203 = vmul.f32 %v202, 0.125
        %v204 = vrot.slane %v196, 4
        %v205 = vadd.f32 %v196, %v204
        %v206 = vrot.slane %v205, 2
        %v207 = vadd.f32 %v205, %v206
        %v208 = vrot.slane %v207, 1
        %v209 = vadd.f32 %v207, %v208
        %v210 = vmul.f32 %v209, 0.125
        %v211 = vsub.f32 %v195, %v203
        %v212 = vsub.f32 %v196, %v210
        %v213 = vmul.f32 %v211, %v211
        %v214 = vrot.slane %v213, 4
        %v215 = vadd.f32 %v213, %v214
        %v216 = vrot.slane %v215, 2
        %v217 = vadd.f32 %v215, %v216
        %v218 = vrot.slane %v217, 1
        %v219 = vadd.f32 %v217, %v218
        %v220 = vmul.f32 %v219, 0.125
        %v221 = vmul.f32 %v212, %v212
        %v222 = vrot.slane %v221, 4
        %v223 = vadd.f32 %v221, %v222
        %v224 = vrot.slane %v223, 2
        %v225 = vadd.f32 %v223, %v224
        %v226 = vrot.slane %v225, 1
        %v227 = vadd.f32 %v225, %v226
        %v228 = vmul.f32 %v227, 0.125
        %v229 = vmul.f32 %v211, %v212
        %v230 = vrot.slane %v229, 4
        %v231 = vadd.f32 %v229, %v230
        %v232 = vrot.slane %v231, 2
        %v233 = vadd.f32 %v231, %v232
        %v234 = vrot.slane %v233, 1
        %v235 = vadd.f32 %v233, %v234
        %v236 = vmul.f32 %v235, 0.125
        %v237 = vadd.f32 %v220, 1e-12
        %v238 = vadd.f32 %v228, 1e-12
        %v239 = vmul.f32 %v237, %v238
        %v240 = vrsqrt.pop %v239
        %v241 = vmul.f32 %v236, %v240
        %242 = vst [vmem:[%s194] sm:$0x1] %v241
        %s243 = sand.u32 %s82, 1
        %s244 = scalar_lea.sflag [#allocation4], %s243
        %s245 = sand.u32 %s82, 1
        %s246 = scalar_lea.vmem [#allocation7], %s245
        // Predicated region
        $region37: #{tpu_custom_call.1} parent=27 // pred_check
          %p247 = pneg %p92
        $region38: #{tpu_custom_call.1} parent=27 // pred_check_branch
          %249 = sbr.rel (%p247) target = $region40
        $region39: #{tpu_custom_call.1} parent=27 // pred_region
          %s251 = ssub.s32 16, 16
          %252 = vsyncadd %s244, %s251
          %s253 = smul.addr %s22, 16
          %s254 = scalar_lea.hbm %s2, %s253
          %s256 = sshll.u32 %s246, 4
          %s257 = int_to_ptr.vmem [resolvable:$true] %s256
          %259 = dma.vmem_to_hbm [thread:$0]  %s257, 16, %s254, %s244
        $region40: #{tpu_custom_call.1} parent=27 // pred_fallthru
          _
      $region28: #{tpu_custom_call.1} parent=5 // pred_fallthru
        _
      %p260 = scmp.le.s32.totalorder 2, %s17
      // Predicated region
      $region41: #{tpu_custom_call.1} parent=5 // pred_check
        %p261 = pneg %p260
      $region42: #{tpu_custom_call.1} parent=5 // pred_check_branch
        %263 = sbr.rel (%p261) target = $region44
      $region43: #{tpu_custom_call.1} parent=5 // pred_region
        %s264 = ssub.s32 %s17, 2
        // Predicated region
        $region45: #{tpu_custom_call.1} parent=43 // pred_check
          %p265 = pneg %p98
        $region46: #{tpu_custom_call.1} parent=43 // pred_check_branch
          %267 = sbr.rel (%p265) target = $region48
        $region47: #{tpu_custom_call.1} parent=43 // pred_region
          %s268 = sand.u32 %s83, 1
          %s269 = scalar_lea.sflag [#allocation4], %s268
          %s270 = sand.u32 %s83, 1
          %s271 = scalar_lea.vmem [#allocation7], %s270
          %272 = dma.done %s269, 16
        $region48: #{tpu_custom_call.1} parent=43 // pred_fallthru
          _
      $region44: #{tpu_custom_call.1} parent=5 // pred_fallthru
        _
    $region6: #{tpu_custom_call.1} parent=1 // loop_footer
      %s21 = sadd.s32 1, %s17
    $region7: #{tpu_custom_call.1} parent=1 // loop_footer_branch
      %16 = sbr.rel target = $region3
    $region8: #{tpu_custom_call.1} parent=1 // loop_exit
      _
    %273 = vsyncpa [#allocation3], 1
    %s274 = scalar_lea.sflag [#allocation3], 1
    %275 = vsyncpa %s274, 1
    %276 = vsyncpa [#allocation6], 1
    %s277 = scalar_lea.sflag [#allocation6], 1
    %278 = vsyncpa %s277, 1
    %279 = vsyncpa [#allocation4], 1
    %s280 = scalar_lea.sflag [#allocation4], 1
    %281 = vsyncpa %s280, 1

</llo_original>
